<compile_context>
chip_gen: v5e
topology: v5e:2x2
jax: 0.10.0
libtpu: 0.0.40
codegen_flags: <defaults>
</compile_context>

<pallas_src>
import functools

import jax
import jax.numpy as jnp
from jax.experimental import pallas as pl
from jax.experimental.pallas import tpu as pltpu


def _nconv_kernel(a_ref, x_ref, o_ref, *, nb, cb):
    # a_ref: (nb, W, V)      adjacency tile (resident across the channel axis)
    # x_ref: (nb, cb, V, L)  natural-layout input tile
    # o_ref: (nb, cb, W, L)  natural-layout output tile
    for b in range(nb):                      # static unroll (nb*cb <= 128)
        a = a_ref[b]                         # (W, V), loaded once per batch row
        for c in range(cb):
            y = jnp.dot(a, x_ref[b, c],
                        preferred_element_type=jnp.float32)   # (W, L) f32 acc
            o_ref[b, c] = y.astype(o_ref.dtype)


def _round_up(x, m):
    return (x + m - 1) // m * m


def _padded_tile_bytes(rows, cols, itemsize):
    """VMEM footprint of a (rows, cols) tile with sublane/lane padding."""
    sublane = 8 * (4 // max(1, itemsize))     # 8 (f32), 16 (bf16)
    return _round_up(max(rows, 1), sublane) * _round_up(max(cols, 1), 128) * itemsize


def _choose_tiles(N, C, V, W, L, in_isz, out_isz, *, vmem_budget,
                  cb_max=64, unroll_max=128, step_bytes_target=2 << 20):
    """Pick (nb, cb, vmem_limit): batch/channel tile sizes vs. a VMEM budget."""
    x_c = _padded_tile_bytes(V, L, in_isz)    # per-channel x block footprint
    o_c = _padded_tile_bytes(W, L, out_isz)   # per-channel out block footprint
    a_b = _padded_tile_bytes(W, V, in_isz)    # per-batch-row A footprint

    per_c = 2 * (x_c + o_c)                   # double-buffered
    avail = vmem_budget - 2 * a_b
    cb = max(1, min(C, cb_max, avail // per_c if avail > per_c else 1))

    # Grow the batch tile until per-step HBM bytes amortize the fixed per-step
    # overhead, staying inside the VMEM budget and a sane unroll count.
    per_b_hbm = cb * (V * L * in_isz + W * L * out_isz) + W * V * in_isz
    per_b_vmem = 2 * (a_b + cb * (x_c + o_c))
    nb = 1
    while (2 * nb <= N
           and 2 * nb * cb <= unroll_max
           and 2 * nb * per_b_vmem <= vmem_budget
           and nb * per_b_hbm < step_bytes_target):
        nb *= 2

    # Keep the grid extent >= 2 whenever possible (v7x has 2 TensorCores).
    if pl.cdiv(N, nb) * pl.cdiv(C, cb) < 2:
        if N >= 2:
            nb = (N + 1) // 2
        elif C >= 2:
            cb = (C + 1) // 2

    vmem_need = 2 * nb * (a_b + cb * (x_c + o_c)) + (4 << 20)    # + headroom
    vmem_limit = int(min(max(vmem_need, 32 << 20), 56 << 20))
    return int(nb), int(cb), vmem_limit


def nconv_batch_pallas(x, A, *, compute_dtype=jnp.bfloat16,
                       vmem_budget_bytes=24 << 20):
    """Pallas-TPU forward of nconv_batch.

    x: (N, C, V, L), A: (N, W, V)  ->  (N, C, W, L) in x.dtype.

    compute_dtype: dtype fed to the MXU (accumulation is f32 regardless).
    bf16 halves x/A HBM read traffic when the casts fuse with upstream
    producers; pass None or jnp.float32 for full-precision inputs.
    """
    N, C, V, L = x.shape
    Na, W, Va = A.shape
    assert Na == N and Va == V, "A must be (N, W, V) matching x (N, C, V, L)"

    out_dtype = x.dtype
    cdt = jnp.dtype(x.dtype) if compute_dtype is None else jnp.dtype(compute_dtype)
    x_in = x.astype(cdt)
    A_in = A.astype(cdt)

    in_isz = cdt.itemsize
    out_isz = jnp.dtype(out_dtype).itemsize
    nb, cb, vmem_limit = _choose_tiles(N, C, V, W, L, in_isz, out_isz,
                                       vmem_budget=vmem_budget_bytes)
    grid = (pl.cdiv(N, nb), pl.cdiv(C, cb))

    cost = pl.CostEstimate(
        flops=2 * N * C * W * V * L,
        transcendentals=0,
        bytes_accessed=(N * C * V * L + N * W * V) * in_isz
                        + N * C * W * L * out_isz,
    )

    return pl.pallas_call(
        functools.partial(_nconv_kernel, nb=nb, cb=cb),
        out_shape=jax.ShapeDtypeStruct((N, C, W, L), out_dtype),
        grid=grid,
        in_specs=[
            # A tile: block index constant along the channel axis -> fetched
            # once per batch tile and kept resident across channel tiles.
            pl.BlockSpec((nb, W, V), lambda bt, ct: (bt, 0, 0)),
            pl.BlockSpec((nb, cb, V, L), lambda bt, ct: (bt, ct, 0, 0)),
        ],
        out_specs=pl.BlockSpec((nb, cb, W, L), lambda bt, ct: (bt, ct, 0, 0)),
        compiler_params=pltpu.CompilerParams(
            dimension_semantics=("parallel", "parallel"),
            vmem_limit_bytes=vmem_limit,
        ),
        cost_estimate=cost,
    )(A_in, x_in)


def nconv_batch_reference(x, A):
    """Pure-JAX replica of the PyTorch forward for validation."""
    At = jnp.swapaxes(A, -1, -2)
    return jnp.einsum('ncvl,nvw->ncwl', x, At)


if __name__ == "__main__":
    # Small shapes consistent with the module: x (batch, channels, nodes, time),
    # A (batch, nodes_out, nodes_in).
    N, C, V, W, L = 2, 4, 16, 16, 8

    key = jax.random.PRNGKey(0)
    kx, ka = jax.random.split(key)
    x = jax.random.normal(kx, (N, C, V, L), dtype=jnp.float32)
    A = jax.random.normal(ka, (N, W, V), dtype=jnp.float32)

    ref = nconv_batch_reference(x, A)

    # Default path: bf16 MXU inputs, f32 accumulation (tolerance gated on dtype).
    out = jax.block_until_ready(jax.jit(nconv_batch_pallas)(x, A))
    assert out.shape == (N, C, W, L) and out.dtype == x.dtype
    assert jnp.max(jnp.abs(out - ref)) < 2.5e-1

    # Full-precision path keeps the original strict check.
    f32_call = jax.jit(functools.partial(nconv_batch_pallas,
                                         compute_dtype=jnp.float32))
    out_f32 = jax.block_until_ready(f32_call(x, A))
    assert jnp.max(jnp.abs(out_f32 - ref)) < 1e-4

    print("KERNEL_OK")
</pallas_src>

<mosaic_0001>
module attributes {stable_mosaic.version = 11 : i64} {
  func.func @_nconv_kernel(%arg0: i32, %arg1: i32, %arg2: memref<1x16x16xbf16, #tpu.memory_space<vmem>>, %arg3: memref<1x4x16x8xbf16, #tpu.memory_space<vmem>>, %arg4: memref<1x4x16x8xf32, #tpu.memory_space<vmem>>) attributes {dimension_semantics = [#tpu.dimension_semantics<parallel>, #tpu.dimension_semantics<parallel>], iteration_bounds = array<i64: 2, 1>, scalar_prefetch = 0 : i64, scratch_operands = 0 : i64, tpu.core_type = #tpu.core_type<tc>, window_params = [{transform_indices = @transform_0, window_bounds = array<i64: 1, 16, 16>}, {transform_indices = @transform_1, window_bounds = array<i64: 1, 4, 16, 8>}, {transform_indices = @transform_2, window_bounds = array<i64: 1, 4, 16, 8>}]} {
    %c0 = arith.constant 0 : index
    %c0_0 = arith.constant 0 : index
    %c0_1 = arith.constant 0 : index
    %0 = vector.load %arg2[%c0, %c0_0, %c0_1] : memref<1x16x16xbf16, #tpu.memory_space<vmem>>, vector<1x16x16xbf16>
    %1 = vector.shape_cast %0 : vector<1x16x16xbf16> to vector<16x16xbf16>
    %c0_2 = arith.constant 0 : index
    %c0_3 = arith.constant 0 : index
    %c0_4 = arith.constant 0 : index
    %c0_5 = arith.constant 0 : index
    %2 = vector.load %arg3[%c0_2, %c0_3, %c0_4, %c0_5] : memref<1x4x16x8xbf16, #tpu.memory_space<vmem>>, vector<1x1x16x8xbf16>
    %3 = vector.shape_cast %2 : vector<1x1x16x8xbf16> to vector<16x8xbf16>
    %cst = arith.constant dense<0.000000e+00> : vector<16x8xf32>
    %4 = tpu.matmul %1, %3, %cst {dimension_numbers = #tpu.dot_dimension_numbers<[1], [0], [0], [1], [0, 0, 1, 1], [], []>} : vector<16x16xbf16>, vector<16x8xbf16>, vector<16x8xf32> -> vector<16x8xf32>
    %c0_6 = arith.constant 0 : index
    %c0_7 = arith.constant 0 : index
    %c0_8 = arith.constant 0 : index
    %c0_9 = arith.constant 0 : index
    %5 = vector.load %arg4[%c0_6, %c0_7, %c0_8, %c0_9] : memref<1x4x16x8xf32, #tpu.memory_space<vmem>>, vector<1x1x16x8xf32>
    %6 = vector.shape_cast %5 : vector<1x1x16x8xf32> to vector<16x8xf32>
    %7 = vector.shape_cast %4 : vector<16x8xf32> to vector<1x1x16x8xf32>
    tpu.vector_store %arg4[%c0_6, %c0_7, %c0_8, %c0_9], %7 {strides = array<i32>} : memref<1x4x16x8xf32, #tpu.memory_space<vmem>>, vector<1x1x16x8xf32>,
    %c0_10 = arith.constant 0 : index
    %c1 = arith.constant 1 : index
    %c0_11 = arith.constant 0 : index
    %c0_12 = arith.constant 0 : index
    %8 = vector.load %arg3[%c0_10, %c1, %c0_11, %c0_12] : memref<1x4x16x8xbf16, #tpu.memory_space<vmem>>, vector<1x1x16x8xbf16>
    %9 = vector.shape_cast %8 : vector<1x1x16x8xbf16> to vector<16x8xbf16>
    %cst_13 = arith.constant dense<0.000000e+00> : vector<16x8xf32>
    %10 = tpu.matmul %1, %9, %cst_13 {dimension_numbers = #tpu.dot_dimension_numbers<[1], [0], [0], [1], [0, 0, 1, 1], [], []>} : vector<16x16xbf16>, vector<16x8xbf16>, vector<16x8xf32> -> vector<16x8xf32>
    %c0_14 = arith.constant 0 : index
    %c1_15 = arith.constant 1 : index
    %c0_16 = arith.constant 0 : index
    %c0_17 = arith.constant 0 : index
    %11 = vector.load %arg4[%c0_14, %c1_15, %c0_16, %c0_17] : memref<1x4x16x8xf32, #tpu.memory_space<vmem>>, vector<1x1x16x8xf32>
    %12 = vector.shape_cast %11 : vector<1x1x16x8xf32> to vector<16x8xf32>
    %13 = vector.shape_cast %10 : vector<16x8xf32> to vector<1x1x16x8xf32>
    tpu.vector_store %arg4[%c0_14, %c1_15, %c0_16, %c0_17], %13 {strides = array<i32>} : memref<1x4x16x8xf32, #tpu.memory_space<vmem>>, vector<1x1x16x8xf32>,
    %c0_18 = arith.constant 0 : index
    %c2 = arith.constant 2 : index
    %c0_19 = arith.constant 0 : index
    %c0_20 = arith.constant 0 : index
    %14 = vector.load %arg3[%c0_18, %c2, %c0_19, %c0_20] : memref<1x4x16x8xbf16, #tpu.memory_space<vmem>>, vector<1x1x16x8xbf16>
    %15 = vector.shape_cast %14 : vector<1x1x16x8xbf16> to vector<16x8xbf16>
    %cst_21 = arith.constant dense<0.000000e+00> : vector<16x8xf32>
    %16 = tpu.matmul %1, %15, %cst_21 {dimension_numbers = #tpu.dot_dimension_numbers<[1], [0], [0], [1], [0, 0, 1, 1], [], []>} : vector<16x16xbf16>, vector<16x8xbf16>, vector<16x8xf32> -> vector<16x8xf32>
    %c0_22 = arith.constant 0 : index
    %c2_23 = arith.constant 2 : index
    %c0_24 = arith.constant 0 : index
    %c0_25 = arith.constant 0 : index
    %17 = vector.load %arg4[%c0_22, %c2_23, %c0_24, %c0_25] : memref<1x4x16x8xf32, #tpu.memory_space<vmem>>, vector<1x1x16x8xf32>
    %18 = vector.shape_cast %17 : vector<1x1x16x8xf32> to vector<16x8xf32>
    %19 = vector.shape_cast %16 : vector<16x8xf32> to vector<1x1x16x8xf32>
    tpu.vector_store %arg4[%c0_22, %c2_23, %c0_24, %c0_25], %19 {strides = array<i32>} : memref<1x4x16x8xf32, #tpu.memory_space<vmem>>, vector<1x1x16x8xf32>,
    %c0_26 = arith.constant 0 : index
    %c3 = arith.constant 3 : index
    %c0_27 = arith.constant 0 : index
    %c0_28 = arith.constant 0 : index
    %20 = vector.load %arg3[%c0_26, %c3, %c0_27, %c0_28] : memref<1x4x16x8xbf16, #tpu.memory_space<vmem>>, vector<1x1x16x8xbf16>
    %21 = vector.shape_cast %20 : vector<1x1x16x8xbf16> to vector<16x8xbf16>
    %cst_29 = arith.constant dense<0.000000e+00> : vector<16x8xf32>
    %22 = tpu.matmul %1, %21, %cst_29 {dimension_numbers = #tpu.dot_dimension_numbers<[1], [0], [0], [1], [0, 0, 1, 1], [], []>} : vector<16x16xbf16>, vector<16x8xbf16>, vector<16x8xf32> -> vector<16x8xf32>
    %c0_30 = arith.constant 0 : index
    %c3_31 = arith.constant 3 : index
    %c0_32 = arith.constant 0 : index
    %c0_33 = arith.constant 0 : index
    %23 = vector.load %arg4[%c0_30, %c3_31, %c0_32, %c0_33] : memref<1x4x16x8xf32, #tpu.memory_space<vmem>>, vector<1x1x16x8xf32>
    %24 = vector.shape_cast %23 : vector<1x1x16x8xf32> to vector<16x8xf32>
    %25 = vector.shape_cast %22 : vector<16x8xf32> to vector<1x1x16x8xf32>
    tpu.vector_store %arg4[%c0_30, %c3_31, %c0_32, %c0_33], %25 {strides = array<i32>} : memref<1x4x16x8xf32, #tpu.memory_space<vmem>>, vector<1x1x16x8xf32>,
    return
  }
  func.func @transform_0(%arg0: i32, %arg1: i32) -> (i32, i32, i32) {
    %c0_i32 = arith.constant 0 : i32
    %c0_i32_0 = arith.constant 0 : i32
    %c0_i32_1 = arith.constant 0 : i32
    return %arg0, %c0_i32, %c0_i32_0 : i32, i32, i32
  }
  func.func @transform_1(%arg0: i32, %arg1: i32) -> (i32, i32, i32, i32) {
    %c0_i32 = arith.constant 0 : i32
    %c0_i32_0 = arith.constant 0 : i32
    %c0_i32_1 = arith.constant 0 : i32
    return %arg0, %arg1, %c0_i32, %c0_i32_0 : i32, i32, i32, i32
  }
  func.func @transform_2(%arg0: i32, %arg1: i32) -> (i32, i32, i32, i32) {
    %c0_i32 = arith.constant 0 : i32
    %c0_i32_0 = arith.constant 0 : i32
    %c0_i32_1 = arith.constant 0 : i32
    return %arg0, %arg1, %c0_i32, %c0_i32_0 : i32, i32, i32, i32
  }
}

</mosaic_0001>

<llo_original>
// kernel: nconv_batch_pallas.1
$region0: #{nconv_batch_pallas.1}
  #allocation0 [shape = 'u32[]', space=smem, size = 0x4, offset = 0x4, fixed_abs, tag = 'smem constant byte address 0x4 - core index']
  #allocation1 [shape = 'u32[72,128]{1,0:T(1,128)}', space=vmem, size = 0x9000, scoped, tag = 'internal scratch']
  %s0 = inlined_call_operand.vmem [shape: bf16[2,16,16], index: 0, kind: input, shape index: {}]
  %s1 = inlined_call_operand.vmem [shape: bf16[2,4,16,8], index: 1, kind: input, shape index: {}]
  %s2 = inlined_call_operand.vmem [shape: f32[2,4,16,8], index: 2, kind: output, shape index: {}]
  %s3 = sld [smem:[#allocation0]]
  $region41: #{nconv_batch_pallas.1} parent=0
    _
  %s5 = ssub.s32 1, %s3
  %s6 = scalar_select 0, %s5, %s3
  loop: start=0, step=1, limit=4
  $region2: #{nconv_batch_pallas.1} parent=0 // loop_pre_header
    _
  $region3: #{nconv_batch_pallas.1} parent=0 // loop_header
    %s8 = sphi 0, %s12
    %p9 = scmp.ge.s32.totalorder %s8, 4
    %s15 = sphi 0, %s27
    %s16 = sphi 0, %s23
    %s17 = sphi 0, %s15
    %s18 = sphi 0, %s16
    %s19 = sphi 0, %s17
    %s20 = sphi 0, %s18
    %s30 = sphi 0, %s32
    %s33 = sphi 0, %s30
    %s34 = sphi 0, %s33
    %s50 = sphi 0, %s34
    %s58 = sphi 0, %s60
    %s61 = sphi 0, %s58
    %s62 = sphi 0, %s61
    %s78 = sphi 0, %s62
    %s86 = sphi 0, %s88
    %s89 = sphi 0, %s86
    %s90 = sphi 0, %s89
    %s106 = sphi 0, %s90
  $region4: #{nconv_batch_pallas.1} parent=0 // loop_header_branch
    %11 = sbr.rel (%p9) target = $region8
  $region5: #{nconv_batch_pallas.1} parent=0 // loop_body
    %s13 = ssub.s32 %s8, 1
    %s14 = ssub.s32 %s8, 2
    %s21 = sadd.s32 1, %s16
    %p22 = scmp.ge.s32.totalorder %s21, 1
    %s23 = scalar_select %p22, 0, %s21
    %s24 = sadd.s32 1, %s15
    %s25 = scalar_select %p22, %s24, %s15
    %p26 = scmp.ge.s32.totalorder %s25, 2
    %s27 = scalar_select %p26, 0, %s25
    %s28 = ssub.s32 %s15, %s27
    %p29 = scmp.eq.s32.totalorder %s28, 0
    %s31 = sadd.s32 %s30, 1
    %s32 = scalar_select %p29, %s30, %s31
    %p35 = pneg %p29
    %p36 = scmp.eq.s32.totalorder %s8, 1
    %p37 = por %p35, %p36
    %p38 = scmp.ne.s32.totalorder %s30, %s33
    %p39 = scmp.eq.s32.totalorder %s8, 0
    %p40 = por %p38, %p39
    %p41 = scmp.ne.s32.totalorder %s30, %s33
    %p42 = scmp.eq.s32.totalorder %s13, 1
    %p43 = por %p41, %p42
    %p44 = scmp.ne.s32.totalorder %s33, %s34
    %p45 = scmp.eq.s32.totalorder %s13, 0
    %p46 = por %p44, %p45
    %p47 = scmp.ne.s32.totalorder %s33, %s34
    %p48 = scmp.eq.s32.totalorder %s14, 1
    %p49 = por %p47, %p48
    %p51 = scmp.ne.s32.totalorder %s34, %s50
    %p52 = scmp.eq.s32.totalorder %s14, 0
    %p53 = por %p51, %p52
    %s54 = ssub.s32 %s15, %s27
    %s55 = ssub.s32 %s16, %s23
    %s56 = sor.u32 %s54, %s55
    %p57 = scmp.eq.s32.totalorder %s56, 0
    %s59 = sadd.s32 %s58, 1
    %s60 = scalar_select %p57, %s58, %s59
    %p63 = pneg %p57
    %p64 = scmp.eq.s32.totalorder %s8, 1
    %p65 = por %p63, %p64
    %p66 = scmp.ne.s32.totalorder %s58, %s61
    %p67 = scmp.eq.s32.totalorder %s8, 0
    %p68 = por %p66, %p67
    %p69 = scmp.ne.s32.totalorder %s58, %s61
    %p70 = scmp.eq.s32.totalorder %s13, 1
    %p71 = por %p69, %p70
    %p72 = scmp.ne.s32.totalorder %s61, %s62
    %p73 = scmp.eq.s32.totalorder %s13, 0
    %p74 = por %p72, %p73
    %p75 = scmp.ne.s32.totalorder %s61, %s62
    %p76 = scmp.eq.s32.totalorder %s14, 1
    %p77 = por %p75, %p76
    %p79 = scmp.ne.s32.totalorder %s62, %s78
    %p80 = scmp.eq.s32.totalorder %s14, 0
    %p81 = por %p79, %p80
    %s82 = ssub.s32 %s15, %s27
    %s83 = ssub.s32 %s16, %s23
    %s84 = sor.u32 %s82, %s83
    %p85 = scmp.eq.s32.totalorder %s84, 0
    %s87 = sadd.s32 %s86, 1
    %s88 = scalar_select %p85, %s86, %s87
    %p91 = pneg %p85
    %p92 = scmp.eq.s32.totalorder %s8, 1
    %p93 = por %p91, %p92
    %p94 = scmp.ne.s32.totalorder %s86, %s89
    %p95 = scmp.eq.s32.totalorder %s8, 0
    %p96 = por %p94, %p95
    %p97 = scmp.ne.s32.totalorder %s86, %s89
    %p98 = scmp.eq.s32.totalorder %s13, 1
    %p99 = por %p97, %p98
    %p100 = scmp.ne.s32.totalorder %s89, %s90
    %p101 = scmp.eq.s32.totalorder %s13, 0
    %p102 = por %p100, %p101
    %p103 = scmp.ne.s32.totalorder %s89, %s90
    %p104 = scmp.eq.s32.totalorder %s14, 1
    %p105 = por %p103, %p104
    %p107 = scmp.ne.s32.totalorder %s90, %s106
    %p108 = scmp.eq.s32.totalorder %s14, 0
    %p109 = por %p107, %p108
    %p110 = scmp.le.s32.totalorder 1, %s8
    %p111 = scmp.lt.s32.totalorder %s8, 3
    %p112 = pnand %p110, %p111
    %p113 = pneg %p112
    // Predicated region
    $region9: #{nconv_batch_pallas.1} parent=5 // pred_check
      _
    $region10: #{nconv_batch_pallas.1} parent=5 // pred_check_branch
      %115 = sbr.rel (%p112) target = $region12
    $region11: #{nconv_batch_pallas.1} parent=5 // pred_region
      %s116 = ssub.s32 %s8, 1
    $region12: #{nconv_batch_pallas.1} parent=5 // pred_fallthru
      _
    %p117 = scmp.lt.s32.totalorder %s8, 2
    // Predicated region
    $region13: #{nconv_batch_pallas.1} parent=5 // pred_check
      %p118 = pneg %p117
    $region14: #{nconv_batch_pallas.1} parent=5 // pred_check_branch
      %120 = sbr.rel (%p118) target = $region16
    $region15: #{nconv_batch_pallas.1} parent=5 // pred_region
      // Predicated region
      $region17: #{nconv_batch_pallas.1} parent=15 // pred_check
        %p121 = pneg %p40
      $region18: #{nconv_batch_pallas.1} parent=15 // pred_check_branch
        %123 = sbr.rel (%p121) target = $region20
      $region19: #{nconv_batch_pallas.1} parent=15 // pred_region
        %p124 = scmp.lt.s32.totalorder %s15, 1
        %s125 = scalar_select %p124, %s15, 1
        %s126 = smul.addr %s125, 2
        %s127 = smul.addr %s126, 4
        %s128 = scalar_lea.vmem %s0, %s127
      $region20: #{nconv_batch_pallas.1} parent=15 // pred_fallthru
        _
      // Predicated region
      $region21: #{nconv_batch_pallas.1} parent=15 // pred_check
        %p129 = pneg %p68
      $region22: #{nconv_batch_pallas.1} parent=15 // pred_check_branch
        %131 = sbr.rel (%p129) target = $region24
      $region23: #{nconv_batch_pallas.1} parent=15 // pred_region
        %s132 = smul.u32 4, %s16
        %p133 = scmp.lt.s32.totalorder %s15, 1
        %s134 = scalar_select %p133, %s15, 1
        %p135 = scmp.lt.s32.totalorder %s132, 3
        %s136 = scalar_select %p135, %s132, 3
        %s137 = smul.addr %s136, 2
        %s138 = smul.addr %s134, 8
        %s139 = sadd.s32 %s137, %s138
        %s140 = smul.addr %s139, 4
        %s141 = scalar_lea.vmem %s1, %s140
        %s142 = smul.u32 4, %s16
      $region24: #{nconv_batch_pallas.1} parent=15 // pred_fallthru
        _
    $region16: #{nconv_batch_pallas.1} parent=5 // pred_fallthru
      _
    %p143 = scmp.le.s32.totalorder 1, %s8
    %p144 = scmp.lt.s32.totalorder %s8, 3
    %p145 = pnand %p143, %p144
    %p146 = pneg %p145
    // Predicated region
    $region25: #{nconv_batch_pallas.1} parent=5 // pred_check
      _
    $region26: #{nconv_batch_pallas.1} parent=5 // pred_check_branch
      %148 = sbr.rel (%p145) target = $region28
    $region27: #{nconv_batch_pallas.1} parent=5 // pred_region
      %s149 = ssub.s32 %s8, 1
      %p150 = scmp.lt.s32.totalorder %s17, 1
      %s151 = scalar_select %p150, %s17, 1
      %s152 = smul.addr %s151, 2
      %s153 = smul.addr %s152, 4
      %s154 = scalar_lea.vmem %s0, %s153
      %p155 = pneg %p46
      %p156 = pneg %p43
      %s157 = smul.u32 4, %s18
      %p158 = scmp.lt.s32.totalorder %s17, 1
      %s159 = scalar_select %p158, %s17, 1
      %p160 = scmp.lt.s32.totalorder %s157, 3
      %s161 = scalar_select %p160, %s157, 3
      %s162 = smul.addr %s161, 2
      %s163 = smul.addr %s159, 8
      %s164 = sadd.s32 %s162, %s163
      %s165 = smul.addr %s164, 4
      %s166 = scalar_lea.vmem %s1, %s165
      %p167 = pneg %p74
      %p168 = pneg %p71
      %p169 = pneg %p102
      %p170 = pneg %p99
      %s171 = smul.u32 4, %s18
      %p172 = scmp.lt.s32.totalorder %s17, 1
      %s173 = scalar_select %p172, %s17, 1
      %p174 = scmp.lt.s32.totalorder %s171, 3
      %s175 = scalar_select %p174, %s171, 3
      %s176 = smul.addr %s175, 2
      %s177 = smul.addr %s173, 8
      %s178 = sadd.s32 %s176, %s177
      %s179 = smul.addr %s178, 8
      %s180 = scalar_lea.vmem %s2, %s179
      %p181 = scmp.lt.s32.totalorder %s17, 1
      %s182 = scalar_select %p181, %s17, 1
      %s183 = smul.addr %s182, 2
      %s184 = smul.addr %s183, 4
      %s185 = scalar_lea.vmem %s0, %s184
      %s186 = smul.u32 4, %s18
      %p187 = scmp.lt.s32.totalorder %s17, 1
      %s188 = scalar_select %p187, %s17, 1
      %p189 = scmp.lt.s32.totalorder %s186, 3
      %s190 = scalar_select %p189, %s186, 3
      %s191 = smul.addr %s190, 2
      %s192 = smul.addr %s188, 8
      %s193 = sadd.s32 %s191, %s192
      %s194 = smul.addr %s193, 4
      %s195 = scalar_lea.vmem %s1, %s194
      %s196 = smul.u32 4, %s18
      %s197 = smul.u32 4, %s18
      %p198 = scmp.lt.s32.totalorder %s17, 1
      %s199 = scalar_select %p198, %s17, 1
      %p200 = scmp.lt.s32.totalorder %s197, 3
      %s201 = scalar_select %p200, %s197, 3
      %s202 = smul.addr %s201, 2
      %s203 = smul.addr %s199, 8
      %s204 = sadd.s32 %s202, %s203
      %s205 = smul.addr %s204, 8
      %s206 = scalar_lea.vmem %s2, %s205
      %s207 = smul.u32 4, %s18
      %v209 = vld [vmem:[%s185] sm:$0xf]
      %v210 = vld [vmem:[%s185 + $0x4] sm:$0xf]
      %v211 = vld [vmem:[%s195] sm:$0xf]
      %v212 = vld [vmem:[%s195 + $0x4] sm:$0xf]
      %v215 = vunpack.c.l.b16 %v209
      %v216 = vunpack.c.l.b16 %v210
      %v217 = vpack.c.b16 %v216, %v215
      %v220 = vunpack.c.l.b16 %v211
      %v221 = vunpack.c.l.b16 %v212
      %v222 = vpack.c.b16 %v221, %v220
      %vm224 = vcmask 130048
      %v226 = vsel %vm224, %v217, 0
      %228 = vmatpush.bf16.msra.mxu0 0
      %229 = vmatpush.bf16.msra.mxu0 0
      %230 = vmatpush.bf16.msra.mxu0 0
      %231 = vmatpush.bf16.msra.mxu0 0
      %232 = vmatpush.bf16.msra.mxu0 0
      %233 = vmatpush.bf16.msra.mxu0 0
      %234 = vmatpush.bf16.msra.mxu0 0
      %235 = vmatpush.bf16.msra.mxu0 %v222
      %236 = vmatmul.bf16.gmra.mxu0 %v226
      %v237 = vpop.f32.mrf.mxu0
      %v238 = vadd.f32 0.0, %v237
      %v239 = vpop.f32.mrf.mxu0
      %v240 = vadd.f32 0.0, %v239
      %241 = vdwg.mxu0
      %vm242 = vcmask 64512
      %243 = vst.msk [vmem:[%s206] sm:$0xff] %vm242, %v238
      %244 = vst.msk [vmem:[%s206 + $0x8] sm:$0xff] %vm242, %v240
      %s245 = scalar_lea.vmem %s195, 8
      %v246 = vld [vmem:[%s245] sm:$0xf]
      %v247 = vld [vmem:[%s245 + $0x4] sm:$0xf]
      %v250 = vunpack.c.l.b16 %v246
      %v251 = vunpack.c.l.b16 %v247
      %v252 = vpack.c.b16 %v251, %v250
      %254 = vmatpush.bf16.msra.mxu0 0
      %255 = vmatpush.bf16.msra.mxu0 0
      %256 = vmatpush.bf16.msra.mxu0 0
      %257 = vmatpush.bf16.msra.mxu0 0
      %258 = vmatpush.bf16.msra.mxu0 0
      %259 = vmatpush.bf16.msra.mxu0 0
      %260 = vmatpush.bf16.msra.mxu0 0
      %261 = vmatpush.bf16.msra.mxu0 %v252
      %262 = vmatmul.bf16.gmra.mxu0 %v226
      %v263 = vpop.f32.mrf.mxu0
      %v264 = vadd.f32 0.0, %v263
      %v265 = vpop.f32.mrf.mxu0
      %v266 = vadd.f32 0.0, %v265
      %267 = vdwg.mxu0
      %s268 = scalar_lea.vmem %s206, 16
      %269 = vst.msk [vmem:[%s268] sm:$0xff] %vm242, %v264
      %270 = vst.msk [vmem:[%s268 + $0x8] sm:$0xff] %vm242, %v266
      %s271 = scalar_lea.vmem %s195, 16
      %v272 = vld [vmem:[%s271] sm:$0xf]
      %v273 = vld [vmem:[%s271 + $0x4] sm:$0xf]
      %v276 = vunpack.c.l.b16 %v272
      %v277 = vunpack.c.l.b16 %v273
      %v278 = vpack.c.b16 %v277, %v276
      %280 = vmatpush.bf16.msra.mxu0 0
      %281 = vmatpush.bf16.msra.mxu0 0
      %282 = vmatpush.bf16.msra.mxu0 0
      %283 = vmatpush.bf16.msra.mxu0 0
      %284 = vmatpush.bf16.msra.mxu0 0
      %285 = vmatpush.bf16.msra.mxu0 0
      %286 = vmatpush.bf16.msra.mxu0 0
      %287 = vmatpush.bf16.msra.mxu0 %v278
      %288 = vmatmul.bf16.gmra.mxu0 %v226
      %v289 = vpop.f32.mrf.mxu0
      %v290 = vadd.f32 0.0, %v289
      %v291 = vpop.f32.mrf.mxu0
      %v292 = vadd.f32 0.0, %v291
      %293 = vdwg.mxu0
      %s294 = scalar_lea.vmem %s206, 32
      %295 = vst.msk [vmem:[%s294] sm:$0xff] %vm242, %v290
      %296 = vst.msk [vmem:[%s294 + $0x8] sm:$0xff] %vm242, %v292
      %s297 = scalar_lea.vmem %s195, 24
      %v298 = vld [vmem:[%s297] sm:$0xf]
      %v299 = vld [vmem:[%s297 + $0x4] sm:$0xf]
      %v302 = vunpack.c.l.b16 %v298
      %v303 = vunpack.c.l.b16 %v299
      %v304 = vpack.c.b16 %v303, %v302
      %306 = vmatpush.bf16.msra.mxu0 0
      %307 = vmatpush.bf16.msra.mxu0 0
      %308 = vmatpush.bf16.msra.mxu0 0
      %309 = vmatpush.bf16.msra.mxu0 0
      %310 = vmatpush.bf16.msra.mxu0 0
      %311 = vmatpush.bf16.msra.mxu0 0
      %312 = vmatpush.bf16.msra.mxu0 0
      %313 = vmatpush.bf16.msra.mxu0 %v304
      %314 = vmatmul.bf16.gmra.mxu0 %v226
      %v315 = vpop.f32.mrf.mxu0
      %v316 = vadd.f32 0.0, %v315
      %v317 = vpop.f32.mrf.mxu0
      %v318 = vadd.f32 0.0, %v317
      %319 = vdwg.mxu0
      %s320 = scalar_lea.vmem %s206, 48
      %321 = vst.msk [vmem:[%s320] sm:$0xff] %vm242, %v316
      %322 = vst.msk [vmem:[%s320 + $0x8] sm:$0xff] %vm242, %v318
      %s323 = smul.u32 4, %s18
      %p324 = scmp.lt.s32.totalorder %s17, 1
      %s325 = scalar_select %p324, %s17, 1
      %p326 = scmp.lt.s32.totalorder %s323, 3
      %s327 = scalar_select %p326, %s323, 3
      %s328 = smul.addr %s327, 2
      %s329 = smul.addr %s325, 8
      %s330 = sadd.s32 %s328, %s329
      %s331 = smul.addr %s330, 8
      %s332 = scalar_lea.vmem %s2, %s331
      // Predicated region
      $region29: #{nconv_batch_pallas.1} parent=27 // pred_check
        %p333 = pneg %p99
      $region30: #{nconv_batch_pallas.1} parent=27 // pred_check_branch
        %335 = sbr.rel (%p333) target = $region32
      $region31: #{nconv_batch_pallas.1} parent=27 // pred_region
        %s336 = smul.u32 4, %s18
      $region32: #{nconv_batch_pallas.1} parent=27 // pred_fallthru
        _
    $region28: #{nconv_batch_pallas.1} parent=5 // pred_fallthru
      _
    %p337 = scmp.le.s32.totalorder 2, %s8
    // Predicated region
    $region33: #{nconv_batch_pallas.1} parent=5 // pred_check
      %p338 = pneg %p337
    $region34: #{nconv_batch_pallas.1} parent=5 // pred_check_branch
      %340 = sbr.rel (%p338) target = $region36
    $region35: #{nconv_batch_pallas.1} parent=5 // pred_region
      %s341 = ssub.s32 %s8, 2
      // Predicated region
      $region37: #{nconv_batch_pallas.1} parent=35 // pred_check
        %p342 = pneg %p105
      $region38: #{nconv_batch_pallas.1} parent=35 // pred_check_branch
        %344 = sbr.rel (%p342) target = $region40
      $region39: #{nconv_batch_pallas.1} parent=35 // pred_region
        %s345 = smul.u32 4, %s20
        %p346 = scmp.lt.s32.totalorder %s19, 1
        %s347 = scalar_select %p346, %s19, 1
        %p348 = scmp.lt.s32.totalorder %s345, 3
        %s349 = scalar_select %p348, %s345, 3
        %s350 = smul.addr %s349, 2
        %s351 = smul.addr %s347, 8
        %s352 = sadd.s32 %s350, %s351
        %s353 = smul.addr %s352, 8
        %s354 = scalar_lea.vmem %s2, %s353
      $region40: #{nconv_batch_pallas.1} parent=35 // pred_fallthru
        _
    $region36: #{nconv_batch_pallas.1} parent=5 // pred_fallthru
      _
  $region6: #{nconv_batch_pallas.1} parent=0 // loop_footer
    %s12 = sadd.s32 1, %s8
  $region7: #{nconv_batch_pallas.1} parent=0 // loop_footer_branch
    %7 = sbr.rel target = $region3
  $region8: #{nconv_batch_pallas.1} parent=0 // loop_exit
    _

</llo_original>
